<compile_context>
chip_gen: v7x
topology: tpu7x:2x2x1
jax: 0.10.0
libtpu: 0.0.40
codegen_flags: <defaults>
</compile_context>

<pallas_src>
import functools

import jax
import jax.numpy as jnp
from jax.experimental import pallas as pl
from jax.experimental.pallas import tpu as pltpu


def _make_attention_kernel(use_mask: bool, approx_recip: bool):
    def kernel(*refs):
        if use_mask:
            atth_ref, patt_ref, feats_ref, mask_ref, wa_ref, out_ref = refs
        else:
            atth_ref, patt_ref, feats_ref, wa_ref, out_ref = refs

        # dot = tanh(p_att_feats + att_h[:, None, :]) in f32 (VPU add + EUP tanh).
        # The narrow->f32 casts are fused into this elementwise chain.
        att_h = atth_ref[...].astype(jnp.float32)[:, None, :]         # (TB, 1, A)
        dot = jnp.tanh(patt_ref[...].astype(jnp.float32) + att_h)     # (TB, L, A) f32

        # alpha_net (bias dropped: softmax is shift-invariant).
        # VPU multiply + lane (XLU) reduce; both units have slack in this
        # DMA-bound kernel, and it avoids TB tiny M=1 MXU matmuls.
        wa = wa_ref[...].astype(jnp.float32)                          # (1, A)
        scores = jnp.sum(dot * wa, axis=-1)                           # (TB, L)

        # Softmax over attention positions (lane axis), mask fused in.
        m = jnp.max(scores, axis=-1, keepdims=True)                   # (TB, 1)
        e = jnp.exp(scores - m)                                       # (TB, L)
        if use_mask:
            # softmax -> *mask -> renorm  ==  exp -> *mask -> single normalize
            e = e * mask_ref[...].astype(jnp.float32)
        # NOTE: an all-zero mask row yields inf/NaN, same as the PyTorch reference.
        denom = jnp.sum(e, axis=-1, keepdims=True)                    # (TB, 1)

        # Weighted sum on the MXU: batched (1, L) x (L, R) with narrow operands
        # and f32 accumulation; normalize afterwards via EUP reciprocal.
        w = e.astype(feats_ref.dtype)[:, None, :]                     # (TB, 1, L)
        acc = jnp.einsum('bql,blr->bqr', w, feats_ref[...],
                         preferred_element_type=jnp.float32)[:, 0, :]  # (TB, R)
        inv = pl.reciprocal(denom, approx=approx_recip)               # (TB, 1)
        out_ref[...] = (acc * inv).astype(out_ref.dtype)

    return kernel


@functools.lru_cache(maxsize=1)
def _tpu_info():
    """(vmem_capacity_bytes, tensorcores_per_chip) with conservative fallbacks."""
    vmem = 64 * 1024 * 1024          # conservative (v7x) default
    cores = 1
    try:
        info = pltpu.get_tpu_info()
        vmem = int(getattr(info, "vmem_capacity_bytes", vmem))
    except Exception:
        pass
    try:
        kind = jax.devices()[0].device_kind.lower()
        if "v7" in kind:
            cores = 2                # v7x: 2 TensorCores per chip
    except Exception:
        pass
    return vmem, cores


def _pick_tb(B, L, R, A, *, stream_itemsize, out_itemsize, vmem_limit,
             num_cores, max_tb=None):
    """Largest batch block whose VMEM footprint -- double-buffered streamed
    tiles PLUS the f32 in-kernel intermediates -- stays under `vmem_limit`
    with headroom."""
    per_row = 2 * L * (R + A) * stream_itemsize   # att_feats + p_att_feats (dbl-buf)
    per_row += 2 * (A + L) * stream_itemsize      # att_h + mask tiles (dbl-buf)
    per_row += L * A * 4                          # f32 tanh intermediate (dominant)
    per_row += (4 * L + 2 * R + 8) * 4            # scores/e/w, acc, small temps (f32)
    per_row += 2 * R * out_itemsize               # output block (dbl-buf)

    budget = int(vmem_limit * 0.6)                # headroom for compiler scratch
    cap = max(1, budget // max(per_row, 1))
    cap = min(cap, 1024)
    if max_tb is not None:
        cap = min(cap, int(max_tb))
    if num_cores >= 2 and B >= 16:
        # Only split for multi-TensorCore chips (v7x); on v5e/v6e the grid is a
        # purely serial loop, so keep the block as large as possible.
        cap = min(cap, pl.cdiv(B, num_cores))
    tb = min(B, cap)
    if tb < B:
        # Keep the 2-D operand blocks (att_h / mask / out) sublane-aligned so
        # they satisfy the (8, 128) block constraint.
        if tb >= 8:
            tb = (tb // 8) * 8
        else:
            tb = B if B <= 8 else 8
    return max(int(tb), 1)


def attention_forward(h, att_feats, p_att_feats, params, att_masks=None,
                      stream_dtype=jnp.bfloat16, max_tb=None):
    """Pallas implementation of Attention.forward.

    params = (wh, bh, wa, ba):
      wh: h2att weight pre-transposed to (R, A); bh: (1, A);
      wa: alpha_net weight (1, A); ba: alpha_net bias (unused: softmax is
      invariant to a constant additive offset, so it cannot change the output).

    stream_dtype: dtype used to stream att_feats / p_att_feats / att_h / mask
      through HBM (default bf16 -- the kernel is HBM-bandwidth-bound, so
      halving the streamed bytes is ~2x wall clock).  In-kernel compute stays
      f32 with f32 MXU accumulation.  Pass jnp.float32 for a bit-accurate path.
      In a decoder loop, pre-cast att_feats / p_att_feats to bf16 once outside
      the per-step call so the narrow copies are reused across timesteps.

    For production shapes, pad L / A / R to multiples of 128 so the streamed
    tiles and the output are lane-dense (demo shapes use full-extent blocks).
    """
    wh, bh, wa, _ba = params          # alpha_net bias dropped (softmax-invariant)
    B = att_feats.shape[0]
    R = att_feats.shape[-1]
    A = wh.shape[-1]
    L = att_feats.size // B // R

    if stream_dtype is None:
        stream_dtype = jnp.float32
    stream_dtype = jnp.dtype(stream_dtype)
    out_dtype = h.dtype

    # h2att hoisted out of the kernel: one full-batch (B,R)x(R,A) GEMM in XLA.
    att_h = (h.astype(jnp.float32) @ wh.astype(jnp.float32)
             + bh.astype(jnp.float32).reshape(1, A))                  # (B, A)

    atth_k = att_h.astype(stream_dtype)                               # (B, A)
    patt_k = p_att_feats.reshape(B, L, A).astype(stream_dtype)        # (B, L, A)
    feats_k = att_feats.reshape(B, L, R).astype(stream_dtype)         # (B, L, R)
    wa_k = wa.reshape(1, A).astype(jnp.float32)

    vmem_cap, num_cores = _tpu_info()
    vmem_limit = min(int(vmem_cap * 3 // 4), 112 * 1024 * 1024)       # 48MiB v7x / 96MiB v5e,v6e
    TB = _pick_tb(B, L, R, A,
                  stream_itemsize=stream_dtype.itemsize,
                  out_itemsize=jnp.dtype(out_dtype).itemsize,
                  vmem_limit=vmem_limit, num_cores=num_cores,
                  max_tb=max_tb)
    grid = (pl.cdiv(B, TB),)          # tail block (if any) is masked by Pallas

    use_mask = att_masks is not None
    approx_recip = stream_dtype.itemsize < 4
    kernel = _make_attention_kernel(use_mask, approx_recip)

    in_specs = [
        pl.BlockSpec((TB, A), lambda b: (b, 0)),          # att_h (precomputed)
        pl.BlockSpec((TB, L, A), lambda b: (b, 0, 0)),    # p_att_feats
        pl.BlockSpec((TB, L, R), lambda b: (b, 0, 0)),    # att_feats
    ]
    args = [atth_k, patt_k, feats_k]
    if use_mask:
        mask_k = att_masks.reshape(B, L).astype(stream_dtype)
        in_specs.append(pl.BlockSpec((TB, L), lambda b: (b, 0)))
        args.append(mask_k)
    in_specs.append(pl.BlockSpec((1, A), lambda b: (0, 0)))           # alpha_net weight
    args.append(wa_k)

    out = pl.pallas_call(
        kernel,
        out_shape=jax.ShapeDtypeStruct((B, R), out_dtype),
        grid=grid,
        in_specs=in_specs,
        out_specs=pl.BlockSpec((TB, R), lambda b: (b, 0)),
        compiler_params=pltpu.CompilerParams(
            dimension_semantics=("parallel",),
            vmem_limit_bytes=vmem_limit),
    )(*args)
    return out


def attention_ref(h, att_feats, p_att_feats, params, att_masks=None):
    """Pure-JAX reference (mirrors the PyTorch forward, keeps the bias)."""
    wh, bh, wa, ba = params
    B = att_feats.shape[0]
    R = att_feats.shape[-1]
    A = wh.shape[-1]
    L = att_feats.size // B // R

    att = p_att_feats.reshape(B, L, A)
    att_h = h @ wh + bh                                    # (B, A)
    dot = jnp.tanh(att + att_h[:, None, :])                # (B, L, A)
    scores = jnp.einsum('bla,a->bl', dot, wa[0]) + ba[0, 0]
    w = jax.nn.softmax(scores, axis=1)
    if att_masks is not None:
        w = w * att_masks.reshape(B, L).astype(jnp.float32)
        w = w / jnp.sum(w, axis=1, keepdims=True)
    feats = att_feats.reshape(B, L, R)
    return jnp.einsum('bl,blr->br', w, feats)


if __name__ == "__main__":
    # Small demo shapes consistent with the module (production shapes should be
    # padded to lane multiples of 128):
    B, L, R, A = 8, 16, 32, 32   # batch, att_size, rnn_size, att_hid_size

    key = jax.random.PRNGKey(0)
    k_h, k_af, k_pf, k_wh, k_bh, k_wa, k_ba, k_m = jax.random.split(key, 8)

    h = jax.random.normal(k_h, (B, R), dtype=jnp.float32)
    att_feats = jax.random.normal(k_af, (B, L, R), dtype=jnp.float32)
    p_att_feats = jax.random.normal(k_pf, (B, L, A), dtype=jnp.float32)

    # Deterministic parameter init (shapes match nn.Linear(R, A) and nn.Linear(A, 1)).
    wh = jax.random.normal(k_wh, (R, A), dtype=jnp.float32) * (1.0 / jnp.sqrt(R))
    bh = jax.random.normal(k_bh, (1, A), dtype=jnp.float32) * 0.1
    wa = jax.random.normal(k_wa, (1, A), dtype=jnp.float32) * (1.0 / jnp.sqrt(A))
    ba = jax.random.normal(k_ba, (1, 1), dtype=jnp.float32) * 0.1
    params = (wh, bh, wa, ba)

    # Binary mask with at least one valid position per row.
    att_masks = (jax.random.uniform(k_m, (B, L)) > 0.3).astype(jnp.float32)
    att_masks = att_masks.at[:, 0].set(1.0)

    # 1) Default fast path (bf16 streaming), no mask.
    out = jax.block_until_ready(attention_forward(h, att_feats, p_att_feats, params))
    ref = attention_ref(h, att_feats, p_att_feats, params)
    assert out.shape == (B, R)
    assert jnp.allclose(out, ref, rtol=5e-2, atol=5e-2), "bf16 no-mask mismatch"

    # 2) Default fast path (bf16 streaming), masked.
    out_m = jax.block_until_ready(
        attention_forward(h, att_feats, p_att_feats, params, att_masks=att_masks))
    ref_m = attention_ref(h, att_feats, p_att_feats, params, att_masks=att_masks)
    assert jnp.allclose(out_m, ref_m, rtol=5e-2, atol=5e-2), "bf16 masked mismatch"

    # 3) Bit-accurate path (f32 streaming), masked.
    out_f = jax.block_until_ready(
        attention_forward(h, att_feats, p_att_feats, params, att_masks=att_masks,
                          stream_dtype=jnp.float32))
    assert jnp.allclose(out_f, ref_m, rtol=1e-5, atol=1e-5), "f32 masked mismatch"

    # 4) Non-divisible batch: exercises the cdiv grid + masked tail block (TB=8, B=20).
    B2 = 20
    k2 = jax.random.PRNGKey(1)
    k_h2, k_af2, k_pf2, k_m2 = jax.random.split(k2, 4)
    h2 = jax.random.normal(k_h2, (B2, R), dtype=jnp.float32)
    af2 = jax.random.normal(k_af2, (B2, L, R), dtype=jnp.float32)
    pf2 = jax.random.normal(k_pf2, (B2, L, A), dtype=jnp.float32)
    m2 = (jax.random.uniform(k_m2, (B2, L)) > 0.3).astype(jnp.float32)
    m2 = m2.at[:, 0].set(1.0)
    out_t = jax.block_until_ready(
        attention_forward(h2, af2, pf2, params, att_masks=m2,
                          stream_dtype=jnp.float32, max_tb=8))
    ref_t = attention_ref(h2, af2, pf2, params, att_masks=m2)
    assert out_t.shape == (B2, R)
    assert jnp.allclose(out_t, ref_t, rtol=1e-5, atol=1e-5), "tail-block mismatch"

    print("KERNEL_OK")
</pallas_src>

<mosaic_0001>
module attributes {stable_mosaic.version = 11 : i64} {
  func.func @kernel(%arg0: i32, %arg1: memref<8x32xbf16, #tpu.memory_space<vmem>>, %arg2: memref<8x16x32xbf16, #tpu.memory_space<vmem>>, %arg3: memref<8x16x32xbf16, #tpu.memory_space<vmem>>, %arg4: memref<1x32xf32, #tpu.memory_space<vmem>>, %arg5: memref<8x32xf32, #tpu.memory_space<vmem>>) attributes {dimension_semantics = [#tpu.dimension_semantics<parallel>], iteration_bounds = array<i64: 1>, scalar_prefetch = 0 : i64, scratch_operands = 0 : i64, tpu.core_type = #tpu.core_type<tc>, window_params = [{transform_indices = @transform_0, window_bounds = array<i64: 8, 32>}, {transform_indices = @transform_1, window_bounds = array<i64: 8, 16, 32>}, {transform_indices = @transform_2, window_bounds = array<i64: 8, 16, 32>}, {pipeline_mode = #tpu.pipeline_mode<synchronous>, transform_indices = @transform_3, window_bounds = array<i64: 1, 32>}, {transform_indices = @transform_4, window_bounds = array<i64: 8, 32>}]} {
    %c0 = arith.constant 0 : index
    %c0_0 = arith.constant 0 : index
    %0 = vector.load %arg1[%c0, %c0_0] : memref<8x32xbf16, #tpu.memory_space<vmem>>, vector<8x32xbf16>
    %1 = arith.extf %0 : vector<8x32xbf16> to vector<8x32xf32>
    %2 = vector.shape_cast %1 : vector<8x32xf32> to vector<8x1x32xf32>
    %c0_1 = arith.constant 0 : index
    %c0_2 = arith.constant 0 : index
    %c0_3 = arith.constant 0 : index
    %3 = vector.load %arg2[%c0_1, %c0_2, %c0_3] : memref<8x16x32xbf16, #tpu.memory_space<vmem>>, vector<8x16x32xbf16>
    %4 = arith.extf %3 : vector<8x16x32xbf16> to vector<8x16x32xf32>
    %5 = vector.broadcast %2 : vector<8x1x32xf32> to vector<8x16x32xf32>
    %6 = arith.addf %4, %5 : vector<8x16x32xf32>
    %7 = math.tanh %6 : vector<8x16x32xf32>
    %c0_4 = arith.constant 0 : index
    %c0_5 = arith.constant 0 : index
    %8 = vector.load %arg4[%c0_4, %c0_5] : memref<1x32xf32, #tpu.memory_space<vmem>>, vector<1x32xf32>
    %9 = vector.shape_cast %8 : vector<1x32xf32> to vector<1x1x32xf32>
    %10 = vector.broadcast %9 : vector<1x1x32xf32> to vector<8x16x32xf32>
    %11 = arith.mulf %7, %10 : vector<8x16x32xf32>
    %cst = arith.constant dense<0.000000e+00> : vector<8x16xf32>
    %12 = vector.multi_reduction <add>, %11, %cst [2] : vector<8x16x32xf32> to vector<8x16xf32>
    %cst_6 = arith.constant dense<0xFF800000> : vector<8xf32>
    %13 = vector.multi_reduction <maximumf>, %12, %cst_6 [1] : vector<8x16xf32> to vector<8xf32>
    %14 = vector.shape_cast %13 : vector<8xf32> to vector<8x1xf32>
    %15 = vector.broadcast %14 : vector<8x1xf32> to vector<8x16xf32>
    %16 = arith.subf %12, %15 : vector<8x16xf32>
    %17 = math.exp %16 : vector<8x16xf32>
    %cst_7 = arith.constant dense<0.000000e+00> : vector<8xf32>
    %18 = vector.multi_reduction <add>, %17, %cst_7 [1] : vector<8x16xf32> to vector<8xf32>
    %19 = vector.shape_cast %18 : vector<8xf32> to vector<8x1xf32>
    %20 = arith.truncf %17 : vector<8x16xf32> to vector<8x16xbf16>
    %21 = vector.shape_cast %20 : vector<8x16xbf16> to vector<8x1x16xbf16>
    %c0_8 = arith.constant 0 : index
    %c0_9 = arith.constant 0 : index
    %c0_10 = arith.constant 0 : index
    %22 = vector.load %arg3[%c0_8, %c0_9, %c0_10] : memref<8x16x32xbf16, #tpu.memory_space<vmem>>, vector<8x16x32xbf16>
    "tpu.trace_start"() <{level = 10 : i32, message = "bql,blr->bqr"}> : () -> ()
    %cst_11 = arith.constant dense<0.000000e+00> : vector<8x1x32xf32>
    %23 = tpu.matmul %21, %22, %cst_11 {dimension_numbers = #tpu.dot_dimension_numbers<[2], [1], [1], [2], [0, 0, 0, 1, 1, 2], [0], [0]>} : vector<8x1x16xbf16>, vector<8x16x32xbf16>, vector<8x1x32xf32> -> vector<8x1x32xf32>
    "tpu.trace_stop"() : () -> ()
    %24 = vector.shape_cast %23 : vector<8x1x32xf32> to vector<8x32xf32>
    %25 = tpu.reciprocal %19 {approx = true} : vector<8x1xf32> -> vector<8x1xf32>
    %26 = vector.broadcast %25 : vector<8x1xf32> to vector<8x32xf32>
    %27 = arith.mulf %24, %26 : vector<8x32xf32>
    %c0_12 = arith.constant 0 : index
    %c0_13 = arith.constant 0 : index
    %28 = vector.load %arg5[%c0_12, %c0_13] : memref<8x32xf32, #tpu.memory_space<vmem>>, vector<8x32xf32>
    tpu.vector_store %arg5[%c0_12, %c0_13], %27 {strides = array<i32>} : memref<8x32xf32, #tpu.memory_space<vmem>>, vector<8x32xf32>,
    return
  }
  func.func @transform_0(%arg0: i32) -> (i32, i32) {
    %c0_i32 = arith.constant 0 : i32
    %c0_i32_0 = arith.constant 0 : i32
    return %arg0, %c0_i32 : i32, i32
  }
  func.func @transform_1(%arg0: i32) -> (i32, i32, i32) {
    %c0_i32 = arith.constant 0 : i32
    %c0_i32_0 = arith.constant 0 : i32
    %c0_i32_1 = arith.constant 0 : i32
    return %arg0, %c0_i32, %c0_i32_0 : i32, i32, i32
  }
  func.func @transform_2(%arg0: i32) -> (i32, i32, i32) {
    %c0_i32 = arith.constant 0 : i32
    %c0_i32_0 = arith.constant 0 : i32
    %c0_i32_1 = arith.constant 0 : i32
    return %arg0, %c0_i32, %c0_i32_0 : i32, i32, i32
  }
  func.func @transform_3(%arg0: i32) -> (i32, i32) {
    %c0_i32 = arith.constant 0 : i32
    %c0_i32_0 = arith.constant 0 : i32
    %c0_i32_1 = arith.constant 0 : i32
    return %c0_i32, %c0_i32_0 : i32, i32
  }
  func.func @transform_4(%arg0: i32) -> (i32, i32) {
    %c0_i32 = arith.constant 0 : i32
    %c0_i32_0 = arith.constant 0 : i32
    return %arg0, %c0_i32 : i32, i32
  }
}

</mosaic_0001>

<llo_original>
// kernel: tpu_custom_call.1
$region0: #{tpu_custom_call.1}
  #allocation0 [shape = 'u32[]', space=smem, size = 0x4, offset = 0x4, fixed_abs, tag = 'smem constant byte address 0x4 - core index']
  #allocation1 [shape = 'u32[144,128]{1,0:T(1,128)}', space=vmem, size = 0x12000, scoped, tag = 'internal scratch']
  %s0 = inlined_call_operand.hbm [shape: bf16[8,32], index: 0, kind: input, shape index: {}]
  %s1 = inlined_call_operand.hbm [shape: bf16[8,16,32], index: 1, kind: input, shape index: {}]
  %s2 = inlined_call_operand.hbm [shape: bf16[8,16,32], index: 2, kind: input, shape index: {}]
  %s3 = inlined_call_operand.vmem [shape: f32[1,32], index: 3, kind: input, shape index: {}]
  %s4 = inlined_call_operand.hbm [shape: f32[8,32], index: 4, kind: output, shape index: {}]
  %s5 = sld [smem:[#allocation0]]
  $region38: #{tpu_custom_call.1} parent=0
    _
  %s7 = ssub.s32 1, %s5
  %s8 = scalar_select 0, %s7, %s5
  $region1: #{tpu_custom_call.1} parent=0
    #allocation2 [shape = 'u8[2048]{0}', space=vmem, size = 0x800, scoped, tag = 'input window, operand 0, single buffered']
    #allocation3 [shape = 's32[1]{0}', space=sflag, size = 0x4, scoped, tag = 'scoped memory for tpu_custom_call.1']
    #allocation4 [shape = 's32[1]{0}', space=sflag, size = 0x4, scoped, tag = 'scoped memory for tpu_custom_call.1']
    #allocation5 [shape = 'u8[32768]{0}', space=vmem, size = 0x8000, scoped, tag = 'input window, operand 1, single buffered']
    #allocation6 [shape = 's32[1]{0}', space=sflag, size = 0x4, scoped, tag = 'scoped memory for tpu_custom_call.1']
    #allocation7 [shape = 'u8[32768]{0}', space=vmem, size = 0x8000, scoped, tag = 'input window, operand 2, single buffered']
    #allocation8 [shape = 'u8[4096]{0}', space=vmem, size = 0x1000, scoped, tag = 'output window, operand 0, single buffered']
    %9 = vsyncpa [#allocation3], 0
    %10 = vsyncpa [#allocation6], 0
    %11 = vsyncpa [#allocation4], 0
    // Predicated region
    $region2: #{tpu_custom_call.1} parent=1 // pred_check
      _
    $region3: #{tpu_custom_call.1} parent=1 // pred_check_branch
      %13 = sbr.rel (0) target = $region5
    $region4: #{tpu_custom_call.1} parent=1 // pred_region
      %s15 = ssub.s32 64, 64
      %16 = vsyncadd [#allocation3], %s15
      %s18 = sshll.u32 [#allocation2], 4
      %s19 = int_to_ptr.vmem [resolvable:$true] %s18
      %21 = dma.hbm_to_vmem [thread:$0]  %s0, 64, %s19, [#allocation3]
    $region5: #{tpu_custom_call.1} parent=1 // pred_fallthru
      _
    // Predicated region
    $region6: #{tpu_custom_call.1} parent=1 // pred_check
      _
    $region7: #{tpu_custom_call.1} parent=1 // pred_check_branch
      %23 = sbr.rel (0) target = $region9
    $region8: #{tpu_custom_call.1} parent=1 // pred_region
      %s25 = ssub.s32 1024, 1024
      %26 = vsyncadd [#allocation6], %s25
      %s27 = sshll.u32 [#allocation5], 4
      %s28 = int_to_ptr.vmem [resolvable:$true] %s27
      %33 = dma.hbm_to_vmem [thread:$0]  %s1, 1024, %s28, [#allocation6], 64, 64, 4
    $region9: #{tpu_custom_call.1} parent=1 // pred_fallthru
      _
    // Predicated region
    $region10: #{tpu_custom_call.1} parent=1 // pred_check
      _
    $region11: #{tpu_custom_call.1} parent=1 // pred_check_branch
      %35 = sbr.rel (0) target = $region13
    $region12: #{tpu_custom_call.1} parent=1 // pred_region
      %s37 = ssub.s32 1024, 1024
      %38 = vsyncadd [#allocation6], %s37
      %s39 = sshll.u32 [#allocation7], 4
      %s40 = int_to_ptr.vmem [resolvable:$true] %s39
      %45 = dma.hbm_to_vmem [thread:$0]  %s2, 1024, %s40, [#allocation6], 64, 64, 4
    $region13: #{tpu_custom_call.1} parent=1 // pred_fallthru
      _
    // Predicated region
    $region14: #{tpu_custom_call.1} parent=1 // pred_check
      _
    $region15: #{tpu_custom_call.1} parent=1 // pred_check_branch
      %47 = sbr.rel (0) target = $region17
    $region16: #{tpu_custom_call.1} parent=1 // pred_region
      _
    $region17: #{tpu_custom_call.1} parent=1 // pred_fallthru
      _
    // Predicated region
    $region18: #{tpu_custom_call.1} parent=1 // pred_check
      _
    $region19: #{tpu_custom_call.1} parent=1 // pred_check_branch
      %49 = sbr.rel (0) target = $region21
    $region20: #{tpu_custom_call.1} parent=1 // pred_region
      %50 = dma.done [#allocation3], 64
    $region21: #{tpu_custom_call.1} parent=1 // pred_fallthru
      _
    // Predicated region
    $region22: #{tpu_custom_call.1} parent=1 // pred_check
      _
    $region23: #{tpu_custom_call.1} parent=1 // pred_check_branch
      %52 = sbr.rel (0) target = $region25
    $region24: #{tpu_custom_call.1} parent=1 // pred_region
      %53 = dma.done [#allocation6], 1024
    $region25: #{tpu_custom_call.1} parent=1 // pred_fallthru
      _
    // Predicated region
    $region26: #{tpu_custom_call.1} parent=1 // pred_check
      _
    $region27: #{tpu_custom_call.1} parent=1 // pred_check_branch
      %55 = sbr.rel (0) target = $region29
    $region28: #{tpu_custom_call.1} parent=1 // pred_region
      %56 = dma.done [#allocation6], 1024
    $region29: #{tpu_custom_call.1} parent=1 // pred_fallthru
      _
    %v58 = vld [vmem:[#allocation2] sm:$0xf]
    %v59 = vunpack.c.l.bf16 %v58
    %v61 = vcombine.high %v59, %v59
    %v63 = vunpack.c.l.s4 1966171168
    %v64 = vunpack.c.0.s8 %v63
    %v65 = vlaneseq
    %v66 = vshrl.u32 %v65, 7
    %v67 = vsub.s32 %v64, %v66
    %v68 = vrot.slane %v59, %v67
    %v70 = vunpack.c.l.s4 1966171168
    %v71 = vunpack.c.0.s8 %v70
    %v72 = vlaneseq
    %v73 = vshrl.u32 %v72, 7
    %v74 = vsub.s32 %v71, %v73
    %v75 = vrot.slane %v61, %v74
    %v76 = vcombine.high %v68, %v68
    %v77 = vcombine.high %v75, %v75
    %v79 = vunpack.c.l.s4 1966171168
    %v80 = vunpack.c.0.s8 %v79
    %v81 = vlaneseq
    %v82 = vshrl.u32 %v81, 7
    %v83 = vsub.s32 %v80, %v82
    %v84 = vrot.slane %v68, %v83
    %v86 = vunpack.c.l.s4 1966171168
    %v87 = vunpack.c.0.s8 %v86
    %v88 = vlaneseq
    %v89 = vshrl.u32 %v88, 7
    %v90 = vsub.s32 %v87, %v89
    %v91 = vrot.slane %v75, %v90
    %v93 = vunpack.c.l.s4 1966171168
    %v94 = vunpack.c.0.s8 %v93
    %v95 = vlaneseq
    %v96 = vshrl.u32 %v95, 7
    %v97 = vsub.s32 %v94, %v96
    %v98 = vrot.slane %v76, %v97
    %v100 = vunpack.c.l.s4 1966171168
    %v101 = vunpack.c.0.s8 %v100
    %v102 = vlaneseq
    %v103 = vshrl.u32 %v102, 7
    %v104 = vsub.s32 %v101, %v103
    %v105 = vrot.slane %v77, %v104
    %v106 = vcombine.high %v84, %v84
    %v107 = vcombine.high %v91, %v91
    %v108 = vcombine.high %v98, %v98
    %v109 = vcombine.high %v105, %v105
    %v110 = vld [vmem:[#allocation5] sm:$0xf]
    %v111 = vld [vmem:[#allocation5 + $0x4] sm:$0xf]
    %v112 = vld [vmem:[#allocation5 + $0x8] sm:$0xf]
    %v113 = vld [vmem:[#allocation5 + $0xc] sm:$0xf]
    %v114 = vld [vmem:[#allocation5 + $0x10] sm:$0xf]
    %v115 = vld [vmem:[#allocation5 + $0x14] sm:$0xf]
    %v116 = vld [vmem:[#allocation5 + $0x18] sm:$0xf]
    %v117 = vld [vmem:[#allocation5 + $0x1c] sm:$0xf]
    %v118 = vld [vmem:[#allocation5 + $0x20] sm:$0xf]
    %v119 = vld [vmem:[#allocation5 + $0x24] sm:$0xf]
    %v120 = vld [vmem:[#allocation5 + $0x28] sm:$0xf]
    %v121 = vld [vmem:[#allocation5 + $0x2c] sm:$0xf]
    %v122 = vld [vmem:[#allocation5 + $0x30] sm:$0xf]
    %v123 = vld [vmem:[#allocation5 + $0x34] sm:$0xf]
    %v124 = vld [vmem:[#allocation5 + $0x38] sm:$0xf]
    %v125 = vld [vmem:[#allocation5 + $0x3c] sm:$0xf]
    %v126 = vunpack.c.l.bf16 %v110
    %v127 = vunpack.c.l.bf16 %v111
    %v128 = vunpack.c.l.bf16 %v112
    %v129 = vunpack.c.l.bf16 %v113
    %v130 = vunpack.c.l.bf16 %v114
    %v131 = vunpack.c.l.bf16 %v115
    %v132 = vunpack.c.l.bf16 %v116
    %v133 = vunpack.c.l.bf16 %v117
    %v134 = vunpack.c.l.bf16 %v118
    %v135 = vunpack.c.l.bf16 %v119
    %v136 = vunpack.c.l.bf16 %v120
    %v137 = vunpack.c.l.bf16 %v121
    %v138 = vunpack.c.l.bf16 %v122
    %v139 = vunpack.c.l.bf16 %v123
    %v140 = vunpack.c.l.bf16 %v124
    %v141 = vunpack.c.l.bf16 %v125
    %v142 = vlaneseq
    %v143 = vshrl.u32 %v142, 7
    %v144 = vsub.s32 0, %v143
    %v145 = vrot.slane %v84, %v144
    %v146 = vlaneseq
    %v147 = vshrl.u32 %v146, 7
    %v148 = vsub.s32 0, %v147
    %v149 = vrot.slane %v98, %v148
    %v150 = vlaneseq
    %v151 = vshrl.u32 %v150, 7
    %v152 = vsub.s32 0, %v151
    %v153 = vrot.slane %v106, %v152
    %v154 = vlaneseq
    %v155 = vshrl.u32 %v154, 7
    %v156 = vsub.s32 0, %v155
    %v157 = vrot.slane %v108, %v156
    %v158 = vlaneseq
    %v159 = vshrl.u32 %v158, 7
    %v160 = vsub.s32 0, %v159
    %v161 = vrot.slane %v91, %v160
    %v162 = vlaneseq
    %v163 = vshrl.u32 %v162, 7
    %v164 = vsub.s32 0, %v163
    %v165 = vrot.slane %v105, %v164
    %v166 = vlaneseq
    %v167 = vshrl.u32 %v166, 7
    %v168 = vsub.s32 0, %v167
    %v169 = vrot.slane %v107, %v168
    %v170 = vlaneseq
    %v171 = vshrl.u32 %v170, 7
    %v172 = vsub.s32 0, %v171
    %v173 = vrot.slane %v109, %v172
    %v182 = vadd.f32 %v126, %v145
    %v183 = vadd.f32 %v127, %v145
    %v184 = vadd.f32 %v128, %v149
    %v185 = vadd.f32 %v129, %v149
    %v186 = vadd.f32 %v130, %v153
    %v187 = vadd.f32 %v131, %v153
    %v188 = vadd.f32 %v132, %v157
    %v189 = vadd.f32 %v133, %v157
    %v190 = vadd.f32 %v134, %v161
    %v191 = vadd.f32 %v135, %v161
    %v192 = vadd.f32 %v136, %v165
    %v193 = vadd.f32 %v137, %v165
    %v194 = vadd.f32 %v138, %v169
    %v195 = vadd.f32 %v139, %v169
    %v196 = vadd.f32 %v140, %v173
    %v197 = vadd.f32 %v141, %v173
    %v198 = vtanh.pop %v182
    %v199 = vtanh.pop %v183
    %v200 = vtanh.pop %v184
    %v201 = vtanh.pop %v185
    %v202 = vtanh.pop %v186
    %v203 = vtanh.pop %v187
    %v204 = vtanh.pop %v188
    %v205 = vtanh.pop %v189
    %v206 = vtanh.pop %v190
    %v207 = vtanh.pop %v191
    %v208 = vtanh.pop %v192
    %v209 = vtanh.pop %v193
    %v210 = vtanh.pop %v194
    %v211 = vtanh.pop %v195
    %v212 = vtanh.pop %v196
    %v213 = vtanh.pop %v197
    %v214 = vld [vmem:[%s3] sm:$0x1]
    %v216 = vlaneseq
    %v217 = vshrl.u32 %v216, 7
    %v218 = vsub.s32 0, %v217
    %v219 = vrot.slane %v214, %v218
    %v221 = vmul.f32 %v198, %v219
    %v222 = vmul.f32 %v199, %v219
    %v223 = vmul.f32 %v200, %v219
    %v224 = vmul.f32 %v201, %v219
    %v225 = vmul.f32 %v202, %v219
    %v226 = vmul.f32 %v203, %v219
    %v227 = vmul.f32 %v204, %v219
    %v228 = vmul.f32 %v205, %v219
    %v229 = vmul.f32 %v206, %v219
    %v230 = vmul.f32 %v207, %v219
    %v231 = vmul.f32 %v208, %v219
    %v232 = vmul.f32 %v209, %v219
    %v233 = vmul.f32 %v210, %v219
    %v234 = vmul.f32 %v211, %v219
    %v235 = vmul.f32 %v212, %v219
    %v236 = vmul.f32 %v213, %v219
    %vm237 = vcmask 261120
    %v238 = vsel %vm237, %v221, 0.0
    %239 = vadd.xlane.f32.xlu0 %v238
    %v240 = vpop.xlane.xlu0 %239
    %v241 = vsel %vm237, %v222, 0.0
    %242 = vadd.xlane.f32.xlu0 %v241
    %v243 = vpop.xlane.xlu0 %242
    %v244 = vsel %vm237, %v223, 0.0
    %245 = vadd.xlane.f32.xlu0 %v244
    %v246 = vpop.xlane.xlu0 %245
    %v247 = vsel %vm237, %v224, 0.0
    %248 = vadd.xlane.f32.xlu0 %v247
    %v249 = vpop.xlane.xlu0 %248
    %v250 = vsel %vm237, %v225, 0.0
    %251 = vadd.xlane.f32.xlu0 %v250
    %v252 = vpop.xlane.xlu0 %251
    %v253 = vsel %vm237, %v226, 0.0
    %254 = vadd.xlane.f32.xlu0 %v253
    %v255 = vpop.xlane.xlu0 %254
    %v256 = vsel %vm237, %v227, 0.0
    %257 = vadd.xlane.f32.xlu0 %v256
    %v258 = vpop.xlane.xlu0 %257
    %v259 = vsel %vm237, %v228, 0.0
    %260 = vadd.xlane.f32.xlu0 %v259
    %v261 = vpop.xlane.xlu0 %260
    %v262 = vsel %vm237, %v229, 0.0
    %263 = vadd.xlane.f32.xlu0 %v262
    %v264 = vpop.xlane.xlu0 %263
    %v265 = vsel %vm237, %v230, 0.0
    %266 = vadd.xlane.f32.xlu0 %v265
    %v267 = vpop.xlane.xlu0 %266
    %v268 = vsel %vm237, %v231, 0.0
    %269 = vadd.xlane.f32.xlu0 %v268
    %v270 = vpop.xlane.xlu0 %269
    %v271 = vsel %vm237, %v232, 0.0
    %272 = vadd.xlane.f32.xlu0 %v271
    %v273 = vpop.xlane.xlu0 %272
    %v274 = vsel %vm237, %v233, 0.0
    %275 = vadd.xlane.f32.xlu0 %v274
    %v276 = vpop.xlane.xlu0 %275
    %v277 = vsel %vm237, %v234, 0.0
    %278 = vadd.xlane.f32.xlu0 %v277
    %v279 = vpop.xlane.xlu0 %278
    %v280 = vsel %vm237, %v235, 0.0
    %281 = vadd.xlane.f32.xlu0 %v280
    %v282 = vpop.xlane.xlu0 %281
    %v283 = vsel %vm237, %v236, 0.0
    %284 = vadd.xlane.f32.xlu0 %v283
    %v285 = vpop.xlane.xlu0 %284
    %v302 = vlaneseq
    %v303 = vand.u32 %v302, 127
    %v304 = vlaneseq
    %v305 = vshrl.u32 %v304, 7
    %v306 = vsub.s32 %v303, %v305
    %v307 = vrot.slane %v240, %v306
    %v308 = vadd.s32 %v303, 4294967288
    %v309 = vlaneseq
    %v310 = vshrl.u32 %v309, 7
    %v311 = vsub.s32 %v308, %v310
    %v312 = vrot.slane %v243, %v311
    %vm313 = vcmask 130112
    %v314 = vsel %vm313, %v312, %v307
    %v315 = vlaneseq
    %v316 = vshrl.u32 %v315, 7
    %v317 = vsub.s32 %v303, %v316
    %v318 = vrot.slane %v246, %v317
    %v319 = vlaneseq
    %v320 = vshrl.u32 %v319, 7
    %v321 = vsub.s32 %v308, %v320
    %v322 = vrot.slane %v249, %v321
    %v323 = vsel %vm313, %v322, %v318
    %v324 = vlaneseq
    %v325 = vshrl.u32 %v324, 7
    %v326 = vsub.s32 %v303, %v325
    %v327 = vrot.slane %v252, %v326
    %v328 = vlaneseq
    %v329 = vshrl.u32 %v328, 7
    %v330 = vsub.s32 %v308, %v329
    %v331 = vrot.slane %v255, %v330
    %v332 = vsel %vm313, %v331, %v327
    %v333 = vlaneseq
    %v334 = vshrl.u32 %v333, 7
    %v335 = vsub.s32 %v303, %v334
    %v336 = vrot.slane %v258, %v335
    %v337 = vlaneseq
    %v338 = vshrl.u32 %v337, 7
    %v339 = vsub.s32 %v308, %v338
    %v340 = vrot.slane %v261, %v339
    %v341 = vsel %vm313, %v340, %v336
    %v342 = vlaneseq
    %v343 = vshrl.u32 %v342, 7
    %v344 = vsub.s32 %v303, %v343
    %v345 = vrot.slane %v264, %v344
    %v346 = vlaneseq
    %v347 = vshrl.u32 %v346, 7
    %v348 = vsub.s32 %v308, %v347
    %v349 = vrot.slane %v267, %v348
    %v350 = vsel %vm313, %v349, %v345
    %v351 = vlaneseq
    %v352 = vshrl.u32 %v351, 7
    %v353 = vsub.s32 %v303, %v352
    %v354 = vrot.slane %v270, %v353
    %v355 = vlaneseq
    %v356 = vshrl.u32 %v355, 7
    %v357 = vsub.s32 %v308, %v356
    %v358 = vrot.slane %v273, %v357
    %v359 = vsel %vm313, %v358, %v354
    %v360 = vlaneseq
    %v361 = vshrl.u32 %v360, 7
    %v362 = vsub.s32 %v303, %v361
    %v363 = vrot.slane %v276, %v362
    %v364 = vlaneseq
    %v365 = vshrl.u32 %v364, 7
    %v366 = vsub.s32 %v308, %v365
    %v367 = vrot.slane %v279, %v366
    %v368 = vsel %vm313, %v367, %v363
    %v369 = vlaneseq
    %v370 = vshrl.u32 %v369, 7
    %v371 = vsub.s32 %v303, %v370
    %v372 = vrot.slane %v282, %v371
    %v373 = vlaneseq
    %v374 = vshrl.u32 %v373, 7
    %v375 = vsub.s32 %v308, %v374
    %v376 = vrot.slane %v285, %v375
    %v377 = vsel %vm313, %v376, %v372
    %vm378 = vcmask 1041409
    %v379 = vsel %vm378, %v323, %v314
    %vm380 = vcmask 1042434
    %v381 = vsel %vm380, %v332, %v379
    %vm382 = vcmask 1043459
    %v383 = vsel %vm382, %v341, %v381
    %vm384 = vcmask 1044484
    %v385 = vsel %vm384, %v350, %v383
    %vm386 = vcmask 1045509
    %v387 = vsel %vm386, %v359, %v385
    %vm388 = vcmask 1046534
    %v389 = vsel %vm388, %v368, %v387
    %vm390 = vcmask 1047559
    %v391 = vsel %vm390, %v377, %v389
    %vm393 = vcmask 130048
    %v394 = vsel %vm393, %v391, -inf
    %395 = vmax.xlane.f32.xlu0 %v394
    %v396 = vpop.xlane.xlu0 %395
    %v398 = vlaneseq
    %v399 = vshrl.u32 %v398, 7
    %v400 = vsub.s32 0, %v399
    %v401 = vrot.slane %v396, %v400
    %v402 = vlaneseq
    %v403 = vshrl.u32 %v402, 7
    %v404 = vsub.s32 1, %v403
    %v405 = vrot.slane %v396, %v404
    %v406 = vlaneseq
    %v407 = vshrl.u32 %v406, 7
    %v408 = vsub.s32 2, %v407
    %v409 = vrot.slane %v396, %v408
    %v410 = vlaneseq
    %v411 = vshrl.u32 %v410, 7
    %v412 = vsub.s32 3, %v411
    %v413 = vrot.slane %v396, %v412
    %v414 = vlaneseq
    %v415 = vshrl.u32 %v414, 7
    %v416 = vsub.s32 4, %v415
    %v417 = vrot.slane %v396, %v416
    %v418 = vlaneseq
    %v419 = vshrl.u32 %v418, 7
    %v420 = vsub.s32 5, %v419
    %v421 = vrot.slane %v396, %v420
    %v422 = vlaneseq
    %v423 = vshrl.u32 %v422, 7
    %v424 = vsub.s32 6, %v423
    %v425 = vrot.slane %v396, %v424
    %v426 = vlaneseq
    %v427 = vshrl.u32 %v426, 7
    %v428 = vsub.s32 7, %v427
    %v429 = vrot.slane %v396, %v428
    %v438 = vsub.f32 %v240, %v401
    %v439 = vsub.f32 %v243, %v401
    %v440 = vsub.f32 %v246, %v405
    %v441 = vsub.f32 %v249, %v405
    %v442 = vsub.f32 %v252, %v409
    %v443 = vsub.f32 %v255, %v409
    %v444 = vsub.f32 %v258, %v413
    %v445 = vsub.f32 %v261, %v413
    %v446 = vsub.f32 %v264, %v417
    %v447 = vsub.f32 %v267, %v417
    %v448 = vsub.f32 %v270, %v421
    %v449 = vsub.f32 %v273, %v421
    %v450 = vsub.f32 %v276, %v425
    %v451 = vsub.f32 %v279, %v425
    %v452 = vsub.f32 %v282, %v429
    %v453 = vsub.f32 %v285, %v429
    %v454 = vmul.f32 %v438, 1.442695
    %v455 = vpow.pop %v454
    %v456 = vmul.f32 %v439, 1.442695
    %v457 = vpow.pop %v456
    %v458 = vmul.f32 %v440, 1.442695
    %v459 = vpow.pop %v458
    %v460 = vmul.f32 %v441, 1.442695
    %v461 = vpow.pop %v460
    %v462 = vmul.f32 %v442, 1.442695
    %v463 = vpow.pop %v462
    %v464 = vmul.f32 %v443, 1.442695
    %v465 = vpow.pop %v464
    %v466 = vmul.f32 %v444, 1.442695
    %v467 = vpow.pop %v466
    %v468 = vmul.f32 %v445, 1.442695
    %v469 = vpow.pop %v468
    %v470 = vmul.f32 %v446, 1.442695
    %v471 = vpow.pop %v470
    %v472 = vmul.f32 %v447, 1.442695
    %v473 = vpow.pop %v472
    %v474 = vmul.f32 %v448, 1.442695
    %v475 = vpow.pop %v474
    %v476 = vmul.f32 %v449, 1.442695
    %v477 = vpow.pop %v476
    %v478 = vmul.f32 %v450, 1.442695
    %v479 = vpow.pop %v478
    %v480 = vmul.f32 %v451, 1.442695
    %v481 = vpow.pop %v480
    %v482 = vmul.f32 %v452, 1.442695
    %v483 = vpow.pop %v482
    %v484 = vmul.f32 %v453, 1.442695
    %v485 = vpow.pop %v484
    %502 = vset.pattern.permute.xlu0 0
    %503 = vperm.xlu0 %502, %v455
    %v504 = vpop.permute.xlu0 %503
    %505 = vset.pattern.permute.xlu0 0
    %506 = vperm.xlu0 %505, %v457
    %v507 = vpop.permute.xlu0 %506
    %508 = vset.pattern.permute.xlu0 0
    %509 = vperm.xlu0 %508, %v459
    %v510 = vpop.permute.xlu0 %509
    %511 = vset.pattern.permute.xlu0 0
    %512 = vperm.xlu0 %511, %v461
    %v513 = vpop.permute.xlu0 %512
    %514 = vset.pattern.permute.xlu0 0
    %515 = vperm.xlu0 %514, %v463
    %v516 = vpop.permute.xlu0 %515
    %517 = vset.pattern.permute.xlu0 0
    %518 = vperm.xlu0 %517, %v465
    %v519 = vpop.permute.xlu0 %518
    %520 = vset.pattern.permute.xlu0 0
    %521 = vperm.xlu0 %520, %v467
    %v522 = vpop.permute.xlu0 %521
    %523 = vset.pattern.permute.xlu0 0
    %524 = vperm.xlu0 %523, %v469
    %v525 = vpop.permute.xlu0 %524
    %526 = vset.pattern.permute.xlu0 0
    %527 = vperm.xlu0 %526, %v471
    %v528 = vpop.permute.xlu0 %527
    %529 = vset.pattern.permute.xlu0 0
    %530 = vperm.xlu0 %529, %v473
    %v531 = vpop.permute.xlu0 %530
    %532 = vset.pattern.permute.xlu0 0
    %533 = vperm.xlu0 %532, %v475
    %v534 = vpop.permute.xlu0 %533
    %535 = vset.pattern.permute.xlu0 0
    %536 = vperm.xlu0 %535, %v477
    %v537 = vpop.permute.xlu0 %536
    %538 = vset.pattern.permute.xlu0 0
    %539 = vperm.xlu0 %538, %v479
    %v540 = vpop.permute.xlu0 %539
    %541 = vset.pattern.permute.xlu0 0
    %542 = vperm.xlu0 %541, %v481
    %v543 = vpop.permute.xlu0 %542
    %544 = vset.pattern.permute.xlu0 0
    %545 = vperm.xlu0 %544, %v483
    %v546 = vpop.permute.xlu0 %545
    %547 = vset.pattern.permute.xlu0 0
    %548 = vperm.xlu0 %547, %v485
    %v549 = vpop.permute.xlu0 %548
    %v550 = vlaneseq
    %v551 = vshrl.u32 %v550, 7
    %v552 = vsub.s32 %v303, %v551
    %v553 = vrot.slane %v504, %v552
    %v554 = vlaneseq
    %v555 = vshrl.u32 %v554, 7
    %v556 = vsub.s32 %v308, %v555
    %v557 = vrot.slane %v507, %v556
    %v558 = vsel %vm313, %v557, %v553
    %v559 = vlaneseq
    %v560 = vshrl.u32 %v559, 7
    %v561 = vsub.s32 %v303, %v560
    %v562 = vrot.slane %v510, %v561
    %v563 = vlaneseq
    %v564 = vshrl.u32 %v563, 7
    %v565 = vsub.s32 %v308, %v564
    %v566 = vrot.slane %v513, %v565
    %v567 = vsel %vm313, %v566, %v562
    %v568 = vlaneseq
    %v569 = vshrl.u32 %v568, 7
    %v570 = vsub.s32 %v303, %v569
    %v571 = vrot.slane %v516, %v570
    %v572 = vlaneseq
    %v573 = vshrl.u32 %v572, 7
    %v574 = vsub.s32 %v308, %v573
    %v575 = vrot.slane %v519, %v574
    %v576 = vsel %vm313, %v575, %v571
    %v577 = vlaneseq
    %v578 = vshrl.u32 %v577, 7
    %v579 = vsub.s32 %v303, %v578
    %v580 = vrot.slane %v522, %v579
    %v581 = vlaneseq
    %v582 = vshrl.u32 %v581, 7
    %v583 = vsub.s32 %v308, %v582
    %v584 = vrot.slane %v525, %v583
    %v585 = vsel %vm313, %v584, %v580
    %v586 = vlaneseq
    %v587 = vshrl.u32 %v586, 7
    %v588 = vsub.s32 %v303, %v587
    %v589 = vrot.slane %v528, %v588
    %v590 = vlaneseq
    %v591 = vshrl.u32 %v590, 7
    %v592 = vsub.s32 %v308, %v591
    %v593 = vrot.slane %v531, %v592
    %v594 = vsel %vm313, %v593, %v589
    %v595 = vlaneseq
    %v596 = vshrl.u32 %v595, 7
    %v597 = vsub.s32 %v303, %v596
    %v598 = vrot.slane %v534, %v597
    %v599 = vlaneseq
    %v600 = vshrl.u32 %v599, 7
    %v601 = vsub.s32 %v308, %v600
    %v602 = vrot.slane %v537, %v601
    %v603 = vsel %vm313, %v602, %v598
    %v604 = vlaneseq
    %v605 = vshrl.u32 %v604, 7
    %v606 = vsub.s32 %v303, %v605
    %v607 = vrot.slane %v540, %v606
    %v608 = vlaneseq
    %v609 = vshrl.u32 %v608, 7
    %v610 = vsub.s32 %v308, %v609
    %v611 = vrot.slane %v543, %v610
    %v612 = vsel %vm313, %v611, %v607
    %v613 = vlaneseq
    %v614 = vshrl.u32 %v613, 7
    %v615 = vsub.s32 %v303, %v614
    %v616 = vrot.slane %v546, %v615
    %v617 = vlaneseq
    %v618 = vshrl.u32 %v617, 7
    %v619 = vsub.s32 %v308, %v618
    %v620 = vrot.slane %v549, %v619
    %v621 = vsel %vm313, %v620, %v616
    %v622 = vsel %vm378, %v567, %v558
    %v623 = vsel %vm380, %v576, %v622
    %v624 = vsel %vm382, %v585, %v623
    %v625 = vsel %vm384, %v594, %v624
    %v626 = vsel %vm386, %v603, %v625
    %v627 = vsel %vm388, %v612, %v626
    %v628 = vsel %vm390, %v621, %v627
    %v630 = vsel %vm393, %v628, 0.0
    %631 = vadd.xlane.f32.xlu0 %v630
    %v632 = vpop.xlane.xlu0 %631
    %v633 = vpack.c.bf16 %v457, %v455
    %v634 = vpack.c.bf16 %v461, %v459
    %v635 = vpack.c.bf16 %v465, %v463
    %v636 = vpack.c.bf16 %v469, %v467
    %v637 = vpack.c.bf16 %v473, %v471
    %v638 = vpack.c.bf16 %v477, %v475
    %v639 = vpack.c.bf16 %v481, %v479
    %v640 = vpack.c.bf16 %v485, %v483
    %v641 = vld [vmem:[#allocation7] sm:$0xf]
    %v642 = vld [vmem:[#allocation7 + $0x4] sm:$0xf]
    %v643 = vld [vmem:[#allocation7 + $0x8] sm:$0xf]
    %v644 = vld [vmem:[#allocation7 + $0xc] sm:$0xf]
    %v645 = vld [vmem:[#allocation7 + $0x10] sm:$0xf]
    %v646 = vld [vmem:[#allocation7 + $0x14] sm:$0xf]
    %v647 = vld [vmem:[#allocation7 + $0x18] sm:$0xf]
    %v648 = vld [vmem:[#allocation7 + $0x1c] sm:$0xf]
    %v649 = vld [vmem:[#allocation7 + $0x20] sm:$0xf]
    %v650 = vld [vmem:[#allocation7 + $0x24] sm:$0xf]
    %v651 = vld [vmem:[#allocation7 + $0x28] sm:$0xf]
    %v652 = vld [vmem:[#allocation7 + $0x2c] sm:$0xf]
    %v653 = vld [vmem:[#allocation7 + $0x30] sm:$0xf]
    %v654 = vld [vmem:[#allocation7 + $0x34] sm:$0xf]
    %v655 = vld [vmem:[#allocation7 + $0x38] sm:$0xf]
    %v656 = vld [vmem:[#allocation7 + $0x3c] sm:$0xf]
    %v658 = vunpack.c.l.b16 %v633
    %v659 = vunpack.c.h.b16 %v633
    %660 = vset.pattern.permute.xlu0 0
    %661 = vperm.xlu0 %660, %v658
    %v662 = vpop.permute.xlu0 %661
    %663 = vset.pattern.permute.xlu0 0
    %664 = vperm.xlu0 %663, %v659
    %v665 = vpop.permute.xlu0 %664
    %v666 = vlaneseq
    %v667 = vshrl.u32 %v666, 7
    %v668 = vsub.s32 %v303, %v667
    %v669 = vrot.slane %v662, %v668
    %v670 = vlaneseq
    %v671 = vshrl.u32 %v670, 7
    %v672 = vsub.s32 %v308, %v671
    %v673 = vrot.slane %v665, %v672
    %v674 = vsel %vm313, %v673, %v669
    %v675 = vpack.c.b16 %v674, %v674
    %v678 = vunpack.c.l.b16 %v641
    %v679 = vunpack.c.l.b16 %v642
    %v680 = vpack.c.b16 %v679, %v678
    %v683 = vsel %vm393, %v675, 0
    %685 = vmatprep.subr.bf16.mxu0 0
    %686 = vmatpush1.bf16.msra.mxu0 %v680
    %687 = vmatprep.subr.bf16.mxu0 0
    %688 = vmatpush1.bf16.msra.mxu0 0
    %689 = vmatprep.subr.bf16.mxu0 0
    %690 = vmatpush1.bf16.msra.mxu0 0
    %691 = vmatprep.subr.bf16.mxu0 0
    %692 = vmatpush1.bf16.msra.mxu0 0
    %693 = vmatprep.subr.bf16.mxu0 0
    %694 = vmatpush1.bf16.msra.mxu0 0
    %695 = vmatprep.subr.bf16.mxu0 0
    %696 = vmatpush1.bf16.msra.mxu0 0
    %697 = vmatprep.subr.bf16.mxu0 0
    %698 = vmatpush1.bf16.msra.mxu0 0
    %699 = vmatprep.subr.bf16.mxu0 0
    %700 = vmatpush1.bf16.msra.mxu0 0
    %701 = vmatprep.subr.bf16.mxu0 0
    %702 = vmatpush1.bf16.msra.mxu0 0
    %703 = vmatprep.subr.bf16.mxu0 0
    %704 = vmatpush1.bf16.msra.mxu0 0
    %705 = vmatprep.subr.bf16.mxu0 0
    %706 = vmatpush1.bf16.msra.mxu0 0
    %707 = vmatprep.subr.bf16.mxu0 0
    %708 = vmatpush1.bf16.msra.mxu0 0
    %709 = vmatprep.subr.bf16.mxu0 0
    %710 = vmatpush1.bf16.msra.mxu0 0
    %711 = vmatprep.subr.bf16.mxu0 0
    %712 = vmatpush1.bf16.msra.mxu0 0
    %713 = vmatprep.subr.bf16.mxu0 0
    %714 = vmatpush1.bf16.msra.mxu0 0
    %715 = vmatprep.subr.bf16.mxu0 0
    %716 = vmatpush1.bf16.msra.mxu0 0
    %717 = vmatprep.mubr.bf16.mxu0 0
    %718 = vmatmul.mubr.bf16.gmra.mrb[0].mxu0 %v683
    %v719 = vpop.f32.mrb[0].mxu0
    %v720 = vadd.f32 0.0, %v719
    %v721 = vpop.f32.mrb[0].mxu0
    %v722 = vpop.f32.mrb[0].mxu0
    %v723 = vpop.f32.mrb[0].mxu0
    %724 = vdwg.mxu0
    %v726 = vunpack.c.l.b16 %v634
    %v727 = vunpack.c.h.b16 %v634
    %728 = vset.pattern.permute.xlu0 0
    %729 = vperm.xlu0 %728, %v726
    %v730 = vpop.permute.xlu0 %729
    %731 = vset.pattern.permute.xlu0 0
    %732 = vperm.xlu0 %731, %v727
    %v733 = vpop.permute.xlu0 %732
    %v734 = vlaneseq
    %v735 = vshrl.u32 %v734, 7
    %v736 = vsub.s32 %v303, %v735
    %v737 = vrot.slane %v730, %v736
    %v738 = vlaneseq
    %v739 = vshrl.u32 %v738, 7
    %v740 = vsub.s32 %v308, %v739
    %v741 = vrot.slane %v733, %v740
    %v742 = vsel %vm313, %v741, %v737
    %v743 = vpack.c.b16 %v742, %v742
    %v746 = vunpack.c.l.b16 %v643
    %v747 = vunpack.c.l.b16 %v644
    %v748 = vpack.c.b16 %v747, %v746
    %v751 = vsel %vm393, %v743, 0
    %753 = vmatprep.subr.bf16.mxu0 0
    %754 = vmatpush1.bf16.msra.mxu0 %v748
    %755 = vmatprep.subr.bf16.mxu0 0
    %756 = vmatpush1.bf16.msra.mxu0 0
    %757 = vmatprep.subr.bf16.mxu0 0
    %758 = vmatpush1.bf16.msra.mxu0 0
    %759 = vmatprep.subr.bf16.mxu0 0
    %760 = vmatpush1.bf16.msra.mxu0 0
    %761 = vmatprep.subr.bf16.mxu0 0
    %762 = vmatpush1.bf16.msra.mxu0 0
    %763 = vmatprep.subr.bf16.mxu0 0
    %764 = vmatpush1.bf16.msra.mxu0 0
    %765 = vmatprep.subr.bf16.mxu0 0
    %766 = vmatpush1.bf16.msra.mxu0 0
    %767 = vmatprep.subr.bf16.mxu0 0
    %768 = vmatpush1.bf16.msra.mxu0 0
    %769 = vmatprep.subr.bf16.mxu0 0
    %770 = vmatpush1.bf16.msra.mxu0 0
    %771 = vmatprep.subr.bf16.mxu0 0
    %772 = vmatpush1.bf16.msra.mxu0 0
    %773 = vmatprep.subr.bf16.mxu0 0
    %774 = vmatpush1.bf16.msra.mxu0 0
    %775 = vmatprep.subr.bf16.mxu0 0
    %776 = vmatpush1.bf16.msra.mxu0 0
    %777 = vmatprep.subr.bf16.mxu0 0
    %778 = vmatpush1.bf16.msra.mxu0 0
    %779 = vmatprep.subr.bf16.mxu0 0
    %780 = vmatpush1.bf16.msra.mxu0 0
    %781 = vmatprep.subr.bf16.mxu0 0
    %782 = vmatpush1.bf16.msra.mxu0 0
    %783 = vmatprep.subr.bf16.mxu0 0
    %784 = vmatpush1.bf16.msra.mxu0 0
    %785 = vmatprep.mubr.bf16.mxu0 0
    %786 = vmatmul.mubr.bf16.gmra.mrb[0].mxu0 %v751
    %v787 = vpop.f32.mrb[0].mxu0
    %v788 = vadd.f32 0.0, %v787
    %v789 = vpop.f32.mrb[0].mxu0
    %v790 = vpop.f32.mrb[0].mxu0
    %v791 = vpop.f32.mrb[0].mxu0
    %792 = vdwg.mxu0
    %v794 = vunpack.c.l.b16 %v635
    %v795 = vunpack.c.h.b16 %v635
    %796 = vset.pattern.permute.xlu0 0
    %797 = vperm.xlu0 %796, %v794
    %v798 = vpop.permute.xlu0 %797
    %799 = vset.pattern.permute.xlu0 0
    %800 = vperm.xlu0 %799, %v795
    %v801 = vpop.permute.xlu0 %800
    %v802 = vlaneseq
    %v803 = vshrl.u32 %v802, 7
    %v804 = vsub.s32 %v303, %v803
    %v805 = vrot.slane %v798, %v804
    %v806 = vlaneseq
    %v807 = vshrl.u32 %v806, 7
    %v808 = vsub.s32 %v308, %v807
    %v809 = vrot.slane %v801, %v808
    %v810 = vsel %vm313, %v809, %v805
    %v811 = vpack.c.b16 %v810, %v810
    %v814 = vunpack.c.l.b16 %v645
    %v815 = vunpack.c.l.b16 %v646
    %v816 = vpack.c.b16 %v815, %v814
    %v819 = vsel %vm393, %v811, 0
    %821 = vmatprep.subr.bf16.mxu0 0
    %822 = vmatpush1.bf16.msra.mxu0 %v816
    %823 = vmatprep.subr.bf16.mxu0 0
    %824 = vmatpush1.bf16.msra.mxu0 0
    %825 = vmatprep.subr.bf16.mxu0 0
    %826 = vmatpush1.bf16.msra.mxu0 0
    %827 = vmatprep.subr.bf16.mxu0 0
    %828 = vmatpush1.bf16.msra.mxu0 0
    %829 = vmatprep.subr.bf16.mxu0 0
    %830 = vmatpush1.bf16.msra.mxu0 0
    %831 = vmatprep.subr.bf16.mxu0 0
    %832 = vmatpush1.bf16.msra.mxu0 0
    %833 = vmatprep.subr.bf16.mxu0 0
    %834 = vmatpush1.bf16.msra.mxu0 0
    %835 = vmatprep.subr.bf16.mxu0 0
    %836 = vmatpush1.bf16.msra.mxu0 0
    %837 = vmatprep.subr.bf16.mxu0 0
    %838 = vmatpush1.bf16.msra.mxu0 0
    %839 = vmatprep.subr.bf16.mxu0 0
    %840 = vmatpush1.bf16.msra.mxu0 0
    %841 = vmatprep.subr.bf16.mxu0 0
    %842 = vmatpush1.bf16.msra.mxu0 0
    %843 = vmatprep.subr.bf16.mxu0 0
    %844 = vmatpush1.bf16.msra.mxu0 0
    %845 = vmatprep.subr.bf16.mxu0 0
    %846 = vmatpush1.bf16.msra.mxu0 0
    %847 = vmatprep.subr.bf16.mxu0 0
    %848 = vmatpush1.bf16.msra.mxu0 0
    %849 = vmatprep.subr.bf16.mxu0 0
    %850 = vmatpush1.bf16.msra.mxu0 0
    %851 = vmatprep.subr.bf16.mxu0 0
    %852 = vmatpush1.bf16.msra.mxu0 0
    %853 = vmatprep.mubr.bf16.mxu0 0
    %854 = vmatmul.mubr.bf16.gmra.mrb[0].mxu0 %v819
    %v855 = vpop.f32.mrb[0].mxu0
    %v856 = vadd.f32 0.0, %v855
    %v857 = vpop.f32.mrb[0].mxu0
    %v858 = vpop.f32.mrb[0].mxu0
    %v859 = vpop.f32.mrb[0].mxu0
    %860 = vdwg.mxu0
    %v862 = vunpack.c.l.b16 %v636
    %v863 = vunpack.c.h.b16 %v636
    %864 = vset.pattern.permute.xlu0 0
    %865 = vperm.xlu0 %864, %v862
    %v866 = vpop.permute.xlu0 %865
    %867 = vset.pattern.permute.xlu0 0
    %868 = vperm.xlu0 %867, %v863
    %v869 = vpop.permute.xlu0 %868
    %v870 = vlaneseq
    %v871 = vshrl.u32 %v870, 7
    %v872 = vsub.s32 %v303, %v871
    %v873 = vrot.slane %v866, %v872
    %v874 = vlaneseq
    %v875 = vshrl.u32 %v874, 7
    %v876 = vsub.s32 %v308, %v875
    %v877 = vrot.slane %v869, %v876
    %v878 = vsel %vm313, %v877, %v873
    %v879 = vpack.c.b16 %v878, %v878
    %v882 = vunpack.c.l.b16 %v647
    %v883 = vunpack.c.l.b16 %v648
    %v884 = vpack.c.b16 %v883, %v882
    %v887 = vsel %vm393, %v879, 0
    %889 = vmatprep.subr.bf16.mxu0 0
    %890 = vmatpush1.bf16.msra.mxu0 %v884
    %891 = vmatprep.subr.bf16.mxu0 0
    %892 = vmatpush1.bf16.msra.mxu0 0
    %893 = vmatprep.subr.bf16.mxu0 0
    %894 = vmatpush1.bf16.msra.mxu0 0
    %895 = vmatprep.subr.bf16.mxu0 0
    %896 = vmatpush1.bf16.msra.mxu0 0
    %897 = vmatprep.subr.bf16.mxu0 0
    %898 = vmatpush1.bf16.msra.mxu0 0
    %899 = vmatprep.subr.bf16.mxu0 0
    %900 = vmatpush1.bf16.msra.mxu0 0
    %901 = vmatprep.subr.bf16.mxu0 0
    %902 = vmatpush1.bf16.msra.mxu0 0
    %903 = vmatprep.subr.bf16.mxu0 0
    %904 = vmatpush1.bf16.msra.mxu0 0
    %905 = vmatprep.subr.bf16.mxu0 0
    %906 = vmatpush1.bf16.msra.mxu0 0
    %907 = vmatprep.subr.bf16.mxu0 0
    %908 = vmatpush1.bf16.msra.mxu0 0
    %909 = vmatprep.subr.bf16.mxu0 0
    %910 = vmatpush1.bf16.msra.mxu0 0
    %911 = vmatprep.subr.bf16.mxu0 0
    %912 = vmatpush1.bf16.msra.mxu0 0
    %913 = vmatprep.subr.bf16.mxu0 0
    %914 = vmatpush1.bf16.msra.mxu0 0
    %915 = vmatprep.subr.bf16.mxu0 0
    %916 = vmatpush1.bf16.msra.mxu0 0
    %917 = vmatprep.subr.bf16.mxu0 0
    %918 = vmatpush1.bf16.msra.mxu0 0
    %919 = vmatprep.subr.bf16.mxu0 0
    %920 = vmatpush1.bf16.msra.mxu0 0
    %921 = vmatprep.mubr.bf16.mxu0 0
    %922 = vmatmul.mubr.bf16.gmra.mrb[0].mxu0 %v887
    %v923 = vpop.f32.mrb[0].mxu0
    %v924 = vadd.f32 0.0, %v923
    %v925 = vpop.f32.mrb[0].mxu0
    %v926 = vpop.f32.mrb[0].mxu0
    %v927 = vpop.f32.mrb[0].mxu0
    %928 = vdwg.mxu0
    %v930 = vunpack.c.l.b16 %v637
    %v931 = vunpack.c.h.b16 %v637
    %932 = vset.pattern.permute.xlu0 0
    %933 = vperm.xlu0 %932, %v930
    %v934 = vpop.permute.xlu0 %933
    %935 = vset.pattern.permute.xlu0 0
    %936 = vperm.xlu0 %935, %v931
    %v937 = vpop.permute.xlu0 %936
    %v938 = vlaneseq
    %v939 = vshrl.u32 %v938, 7
    %v940 = vsub.s32 %v303, %v939
    %v941 = vrot.slane %v934, %v940
    %v942 = vlaneseq
    %v943 = vshrl.u32 %v942, 7
    %v944 = vsub.s32 %v308, %v943
    %v945 = vrot.slane %v937, %v944
    %v946 = vsel %vm313, %v945, %v941
    %v947 = vpack.c.b16 %v946, %v946
    %v950 = vunpack.c.l.b16 %v649
    %v951 = vunpack.c.l.b16 %v650
    %v952 = vpack.c.b16 %v951, %v950
    %v955 = vsel %vm393, %v947, 0
    %957 = vmatprep.subr.bf16.mxu0 0
    %958 = vmatpush1.bf16.msra.mxu0 %v952
    %959 = vmatprep.subr.bf16.mxu0 0
    %960 = vmatpush1.bf16.msra.mxu0 0
    %961 = vmatprep.subr.bf16.mxu0 0
    %962 = vmatpush1.bf16.msra.mxu0 0
    %963 = vmatprep.subr.bf16.mxu0 0
    %964 = vmatpush1.bf16.msra.mxu0 0
    %965 = vmatprep.subr.bf16.mxu0 0
    %966 = vmatpush1.bf16.msra.mxu0 0
    %967 = vmatprep.subr.bf16.mxu0 0
    %968 = vmatpush1.bf16.msra.mxu0 0
    %969 = vmatprep.subr.bf16.mxu0 0
    %970 = vmatpush1.bf16.msra.mxu0 0
    %971 = vmatprep.subr.bf16.mxu0 0
    %972 = vmatpush1.bf16.msra.mxu0 0
    %973 = vmatprep.subr.bf16.mxu0 0
    %974 = vmatpush1.bf16.msra.mxu0 0
    %975 = vmatprep.subr.bf16.mxu0 0
    %976 = vmatpush1.bf16.msra.mxu0 0
    %977 = vmatprep.subr.bf16.mxu0 0
    %978 = vmatpush1.bf16.msra.mxu0 0
    %979 = vmatprep.subr.bf16.mxu0 0
    %980 = vmatpush1.bf16.msra.mxu0 0
    %981 = vmatprep.subr.bf16.mxu0 0
    %982 = vmatpush1.bf16.msra.mxu0 0
    %983 = vmatprep.subr.bf16.mxu0 0
    %984 = vmatpush1.bf16.msra.mxu0 0
    %985 = vmatprep.subr.bf16.mxu0 0
    %986 = vmatpush1.bf16.msra.mxu0 0
    %987 = vmatprep.subr.bf16.mxu0 0
    %988 = vmatpush1.bf16.msra.mxu0 0
    %989 = vmatprep.mubr.bf16.mxu0 0
    %990 = vmatmul.mubr.bf16.gmra.mrb[0].mxu0 %v955
    %v991 = vpop.f32.mrb[0].mxu0
    %v992 = vadd.f32 0.0, %v991
    %v993 = vpop.f32.mrb[0].mxu0
    %v994 = vpop.f32.mrb[0].mxu0
    %v995 = vpop.f32.mrb[0].mxu0
    %996 = vdwg.mxu0
    %v998 = vunpack.c.l.b16 %v638
    %v999 = vunpack.c.h.b16 %v638
    %1000 = vset.pattern.permute.xlu0 0
    %1001 = vperm.xlu0 %1000, %v998
    %v1002 = vpop.permute.xlu0 %1001
    %1003 = vset.pattern.permute.xlu0 0
    %1004 = vperm.xlu0 %1003, %v999
    %v1005 = vpop.permute.xlu0 %1004
    %v1006 = vlaneseq
    %v1007 = vshrl.u32 %v1006, 7
    %v1008 = vsub.s32 %v303, %v1007
    %v1009 = vrot.slane %v1002, %v1008
    %v1010 = vlaneseq
    %v1011 = vshrl.u32 %v1010, 7
    %v1012 = vsub.s32 %v308, %v1011
    %v1013 = vrot.slane %v1005, %v1012
    %v1014 = vsel %vm313, %v1013, %v1009
    %v1015 = vpack.c.b16 %v1014, %v1014
    %v1018 = vunpack.c.l.b16 %v651
    %v1019 = vunpack.c.l.b16 %v652
    %v1020 = vpack.c.b16 %v1019, %v1018
    %v1023 = vsel %vm393, %v1015, 0
    %1025 = vmatprep.subr.bf16.mxu0 0
    %1026 = vmatpush1.bf16.msra.mxu0 %v1020
    %1027 = vmatprep.subr.bf16.mxu0 0
    %1028 = vmatpush1.bf16.msra.mxu0 0
    %1029 = vmatprep.subr.bf16.mxu0 0
    %1030 = vmatpush1.bf16.msra.mxu0 0
    %1031 = vmatprep.subr.bf16.mxu0 0
    %1032 = vmatpush1.bf16.msra.mxu0 0
    %1033 = vmatprep.subr.bf16.mxu0 0
    %1034 = vmatpush1.bf16.msra.mxu0 0
    %1035 = vmatprep.subr.bf16.mxu0 0
    %1036 = vmatpush1.bf16.msra.mxu0 0
    %1037 = vmatprep.subr.bf16.mxu0 0
    %1038 = vmatpush1.bf16.msra.mxu0 0
    %1039 = vmatprep.subr.bf16.mxu0 0
    %1040 = vmatpush1.bf16.msra.mxu0 0
    %1041 = vmatprep.subr.bf16.mxu0 0
    %1042 = vmatpush1.bf16.msra.mxu0 0
    %1043 = vmatprep.subr.bf16.mxu0 0
    %1044 = vmatpush1.bf16.msra.mxu0 0
    %1045 = vmatprep.subr.bf16.mxu0 0
    %1046 = vmatpush1.bf16.msra.mxu0 0
    %1047 = vmatprep.subr.bf16.mxu0 0
    %1048 = vmatpush1.bf16.msra.mxu0 0
    %1049 = vmatprep.subr.bf16.mxu0 0
    %1050 = vmatpush1.bf16.msra.mxu0 0
    %1051 = vmatprep.subr.bf16.mxu0 0
    %1052 = vmatpush1.bf16.msra.mxu0 0
    %1053 = vmatprep.subr.bf16.mxu0 0
    %1054 = vmatpush1.bf16.msra.mxu0 0
    %1055 = vmatprep.subr.bf16.mxu0 0
    %1056 = vmatpush1.bf16.msra.mxu0 0
    %1057 = vmatprep.mubr.bf16.mxu0 0
    %1058 = vmatmul.mubr.bf16.gmra.mrb[0].mxu0 %v1023
    %v1059 = vpop.f32.mrb[0].mxu0
    %v1060 = vadd.f32 0.0, %v1059
    %v1061 = vpop.f32.mrb[0].mxu0
    %v1062 = vpop.f32.mrb[0].mxu0
    %v1063 = vpop.f32.mrb[0].mxu0
    %1064 = vdwg.mxu0
    %v1066 = vunpack.c.l.b16 %v639
    %v1067 = vunpack.c.h.b16 %v639
    %1068 = vset.pattern.permute.xlu0 0
    %1069 = vperm.xlu0 %1068, %v1066
    %v1070 = vpop.permute.xlu0 %1069
    %1071 = vset.pattern.permute.xlu0 0
    %1072 = vperm.xlu0 %1071, %v1067
    %v1073 = vpop.permute.xlu0 %1072
    %v1074 = vlaneseq
    %v1075 = vshrl.u32 %v1074, 7
    %v1076 = vsub.s32 %v303, %v1075
    %v1077 = vrot.slane %v1070, %v1076
    %v1078 = vlaneseq
    %v1079 = vshrl.u32 %v1078, 7
    %v1080 = vsub.s32 %v308, %v1079
    %v1081 = vrot.slane %v1073, %v1080
    %v1082 = vsel %vm313, %v1081, %v1077
    %v1083 = vpack.c.b16 %v1082, %v1082
    %v1086 = vunpack.c.l.b16 %v653
    %v1087 = vunpack.c.l.b16 %v654
    %v1088 = vpack.c.b16 %v1087, %v1086
    %v1091 = vsel %vm393, %v1083, 0
    %1093 = vmatprep.subr.bf16.mxu0 0
    %1094 = vmatpush1.bf16.msra.mxu0 %v1088
    %1095 = vmatprep.subr.bf16.mxu0 0
    %1096 = vmatpush1.bf16.msra.mxu0 0
    %1097 = vmatprep.subr.bf16.mxu0 0
    %1098 = vmatpush1.bf16.msra.mxu0 0
    %1099 = vmatprep.subr.bf16.mxu0 0
    %1100 = vmatpush1.bf16.msra.mxu0 0
    %1101 = vmatprep.subr.bf16.mxu0 0
    %1102 = vmatpush1.bf16.msra.mxu0 0
    %1103 = vmatprep.subr.bf16.mxu0 0
    %1104 = vmatpush1.bf16.msra.mxu0 0
    %1105 = vmatprep.subr.bf16.mxu0 0
    %1106 = vmatpush1.bf16.msra.mxu0 0
    %1107 = vmatprep.subr.bf16.mxu0 0
    %1108 = vmatpush1.bf16.msra.mxu0 0
    %1109 = vmatprep.subr.bf16.mxu0 0
    %1110 = vmatpush1.bf16.msra.mxu0 0
    %1111 = vmatprep.subr.bf16.mxu0 0
    %1112 = vmatpush1.bf16.msra.mxu0 0
    %1113 = vmatprep.subr.bf16.mxu0 0
    %1114 = vmatpush1.bf16.msra.mxu0 0
    %1115 = vmatprep.subr.bf16.mxu0 0
    %1116 = vmatpush1.bf16.msra.mxu0 0
    %1117 = vmatprep.subr.bf16.mxu0 0
    %1118 = vmatpush1.bf16.msra.mxu0 0
    %1119 = vmatprep.subr.bf16.mxu0 0
    %1120 = vmatpush1.bf16.msra.mxu0 0
    %1121 = vmatprep.subr.bf16.mxu0 0
    %1122 = vmatpush1.bf16.msra.mxu0 0
    %1123 = vmatprep.subr.bf16.mxu0 0
    %1124 = vmatpush1.bf16.msra.mxu0 0
    %1125 = vmatprep.mubr.bf16.mxu0 0
    %1126 = vmatmul.mubr.bf16.gmra.mrb[0].mxu0 %v1091
    %v1127 = vpop.f32.mrb[0].mxu0
    %v1128 = vadd.f32 0.0, %v1127
    %v1129 = vpop.f32.mrb[0].mxu0
    %v1130 = vpop.f32.mrb[0].mxu0
    %v1131 = vpop.f32.mrb[0].mxu0
    %1132 = vdwg.mxu0
    %v1134 = vunpack.c.l.b16 %v640
    %v1135 = vunpack.c.h.b16 %v640
    %1136 = vset.pattern.permute.xlu0 0
    %1137 = vperm.xlu0 %1136, %v1134
    %v1138 = vpop.permute.xlu0 %1137
    %1139 = vset.pattern.permute.xlu0 0
    %1140 = vperm.xlu0 %1139, %v1135
    %v1141 = vpop.permute.xlu0 %1140
    %v1142 = vlaneseq
    %v1143 = vshrl.u32 %v1142, 7
    %v1144 = vsub.s32 %v303, %v1143
    %v1145 = vrot.slane %v1138, %v1144
    %v1146 = vlaneseq
    %v1147 = vshrl.u32 %v1146, 7
    %v1148 = vsub.s32 %v308, %v1147
    %v1149 = vrot.slane %v1141, %v1148
    %v1150 = vsel %vm313, %v1149, %v1145
    %v1151 = vpack.c.b16 %v1150, %v1150
    %v1154 = vunpack.c.l.b16 %v655
    %v1155 = vunpack.c.l.b16 %v656
    %v1156 = vpack.c.b16 %v1155, %v1154
    %v1159 = vsel %vm393, %v1151, 0
    %1161 = vmatprep.subr.bf16.mxu0 0
    %1162 = vmatpush1.bf16.msra.mxu0 %v1156
    %1163 = vmatprep.subr.bf16.mxu0 0
    %1164 = vmatpush1.bf16.msra.mxu0 0
    %1165 = vmatprep.subr.bf16.mxu0 0
    %1166 = vmatpush1.bf16.msra.mxu0 0
    %1167 = vmatprep.subr.bf16.mxu0 0
    %1168 = vmatpush1.bf16.msra.mxu0 0
    %1169 = vmatprep.subr.bf16.mxu0 0
    %1170 = vmatpush1.bf16.msra.mxu0 0
    %1171 = vmatprep.subr.bf16.mxu0 0
    %1172 = vmatpush1.bf16.msra.mxu0 0
    %1173 = vmatprep.subr.bf16.mxu0 0
    %1174 = vmatpush1.bf16.msra.mxu0 0
    %1175 = vmatprep.subr.bf16.mxu0 0
    %1176 = vmatpush1.bf16.msra.mxu0 0
    %1177 = vmatprep.subr.bf16.mxu0 0
    %1178 = vmatpush1.bf16.msra.mxu0 0
    %1179 = vmatprep.subr.bf16.mxu0 0
    %1180 = vmatpush1.bf16.msra.mxu0 0
    %1181 = vmatprep.subr.bf16.mxu0 0
    %1182 = vmatpush1.bf16.msra.mxu0 0
    %1183 = vmatprep.subr.bf16.mxu0 0
    %1184 = vmatpush1.bf16.msra.mxu0 0
    %1185 = vmatprep.subr.bf16.mxu0 0
    %1186 = vmatpush1.bf16.msra.mxu0 0
    %1187 = vmatprep.subr.bf16.mxu0 0
    %1188 = vmatpush1.bf16.msra.mxu0 0
    %1189 = vmatprep.subr.bf16.mxu0 0
    %1190 = vmatpush1.bf16.msra.mxu0 0
    %1191 = vmatprep.subr.bf16.mxu0 0
    %1192 = vmatpush1.bf16.msra.mxu0 0
    %1193 = vmatprep.mubr.bf16.mxu0 0
    %1194 = vmatmul.mubr.bf16.gmra.mrb[0].mxu0 %v1159
    %v1195 = vpop.f32.mrb[0].mxu0
    %v1196 = vadd.f32 0.0, %v1195
    %v1197 = vpop.f32.mrb[0].mxu0
    %v1198 = vpop.f32.mrb[0].mxu0
    %v1199 = vpop.f32.mrb[0].mxu0
    %1200 = vdwg.mxu0
    %v1201 = vrcp.pop %v632
    %v1203 = vrot.slane %v1201, 1
    %v1204 = vrot.slane %v1201, 2
    %v1205 = vrot.slane %v1201, 3
    %v1206 = vrot.slane %v1201, 4
    %v1207 = vrot.slane %v1201, 5
    %v1208 = vrot.slane %v1201, 6
    %v1209 = vrot.slane %v1201, 7
    %v1218 = vmul.f32 %v720, %v1201
    %v1219 = vmul.f32 %v788, %v1203
    %v1220 = vmul.f32 %v856, %v1204
    %v1221 = vmul.f32 %v924, %v1205
    %v1222 = vmul.f32 %v992, %v1206
    %v1223 = vmul.f32 %v1060, %v1207
    %v1224 = vmul.f32 %v1128, %v1208
    %v1225 = vmul.f32 %v1196, %v1209
    %v1234 = vrot.slane %v1219, 7
    %v1235 = vsel %vm378, %v1234, %v1218
    %v1236 = vrot.slane %v1220, 6
    %v1237 = vsel %vm380, %v1236, %v1235
    %v1238 = vrot.slane %v1221, 5
    %v1239 = vsel %vm382, %v1238, %v1237
    %v1240 = vrot.slane %v1222, 4
    %v1241 = vsel %vm384, %v1240, %v1239
    %v1242 = vrot.slane %v1223, 3
    %v1243 = vsel %vm386, %v1242, %v1241
    %v1244 = vrot.slane %v1224, 2
    %v1245 = vsel %vm388, %v1244, %v1243
    %v1246 = vrot.slane %v1225, 1
    %v1247 = vsel %vm390, %v1246, %v1245
    %1249 = vst.msk [vmem:[#allocation8] sm:$0xff] %vm237, %v1247
    // Predicated region
    $region30: #{tpu_custom_call.1} parent=1 // pred_check
      _
    $region31: #{tpu_custom_call.1} parent=1 // pred_check_branch
      %1251 = sbr.rel (0) target = $region33
    $region32: #{tpu_custom_call.1} parent=1 // pred_region
      %s1253 = ssub.s32 128, 128
      %1254 = vsyncadd [#allocation4], %s1253
      %s1256 = sshll.u32 [#allocation8], 4
      %s1257 = int_to_ptr.vmem [resolvable:$true] %s1256
      %1259 = dma.vmem_to_hbm [thread:$0]  %s1257, 128, %s4, [#allocation4]
    $region33: #{tpu_custom_call.1} parent=1 // pred_fallthru
      _
    // Predicated region
    $region34: #{tpu_custom_call.1} parent=1 // pred_check
      _
    $region35: #{tpu_custom_call.1} parent=1 // pred_check_branch
      %1261 = sbr.rel (0) target = $region37
    $region36: #{tpu_custom_call.1} parent=1 // pred_region
      %1262 = dma.done [#allocation4], 128
    $region37: #{tpu_custom_call.1} parent=1 // pred_fallthru
      _
    %1263 = vsyncpa [#allocation3], 1
    %1264 = vsyncpa [#allocation6], 1
    %1265 = vsyncpa [#allocation4], 1

</llo_original>
